<compile_context>
chip_gen: v7x
topology: tpu7x:2x2x1
jax: 0.10.0
libtpu: 0.0.40
codegen_flags: <defaults>
</compile_context>

<pallas_src>
import jax
import jax.numpy as jnp
from jax.experimental import pallas as pl
from jax.experimental.pallas import tpu as pltpu


def _identity_kernel(x_ref, o_ref):
    # Elementwise pass-through on the current VMEM tile.
    o_ref[...] = x_ref[...]


def _cdiv(a, b):
    return (a + b - 1) // b


def _round_up(v, m):
    return _cdiv(v, m) * m


def _budgets():
    """Per-generation tile / scoped-VMEM budgets (conservative default = v7x)."""
    block_bytes = 4 * 1024 * 1024       # 4 MiB tile: 4x dbl-buffered = 16 MiB
    vmem_limit = 32 * 1024 * 1024       # safe on v7x (64 MiB VMEM, 2 TCs)
    try:
        vmem_cap = pltpu.get_tpu_info().vmem_capacity_bytes
        if vmem_cap >= 100 * 1024 * 1024:      # v5e / v6e: 128 MiB physical VMEM
            block_bytes = 8 * 1024 * 1024
            vmem_limit = 64 * 1024 * 1024
    except Exception:
        pass                                    # keep conservative defaults
    return block_bytes, vmem_limit


def base_model_forward(x):
    """Identity forward for the abstract BaseModel.

    x: any-rank array.  Viewed lane-dense as (rows, lane) with lane chosen to
    divide the flat length exactly (no padding), copied tile-by-tile through
    VMEM with the output aliased onto the input buffer, and reshaped back.
    Returns an array with the same shape and dtype as x.
    """
    orig_shape = x.shape
    orig_dtype = x.dtype
    total = int(x.size)

    if total == 0:
        return x

    block_bytes, vmem_limit = _budgets()
    itemsize = jnp.dtype(orig_dtype).itemsize

    # Lane-dense width that divides the flat length exactly -> no jnp.pad and
    # no trailing slice (each of which would cost a full extra HBM pass).
    lane = None
    for cand in (512, 256, 128):
        if total % cand == 0:
            lane = cand
            break

    compiler_params = pltpu.CompilerParams(
        dimension_semantics=("parallel",),
        vmem_limit_bytes=vmem_limit,
    )

    if lane is None:
        # Ragged flat length (< multiple of 128): single full-extent block.
        # TODO(synk): for huge non-128-multiple tensors, split off the <128
        # element tail and tile the aligned prefix instead of one big block.
        x2d = x.reshape(1, total)
        out = pl.pallas_call(
            _identity_kernel,
            out_shape=jax.ShapeDtypeStruct((1, total), orig_dtype),
            input_output_aliases={0: 0},
            compiler_params=compiler_params,
        )(x2d)
        return out.reshape(orig_shape)

    rows = total // lane
    x2d = x.reshape(rows, lane)

    # Target tile: ~block_bytes, rows rounded to a multiple of 32 sublanes.
    target_tile_rows = max(32, (block_bytes // (lane * itemsize)) // 32 * 32)
    # Guarantee >=4 grid steps for medium tensors so in/out DMAs overlap.
    pipelined_rows = _round_up(_cdiv(rows, 4), 32)
    tile_rows = min(target_tile_rows, pipelined_rows)
    if tile_rows >= rows:
        tile_rows = rows        # tiny tensor: one full-extent block (legal)

    grid = (_cdiv(rows, tile_rows),)   # ragged last block is masked by Pallas

    out = pl.pallas_call(
        _identity_kernel,
        out_shape=jax.ShapeDtypeStruct((rows, lane), orig_dtype),
        grid_spec=pltpu.PrefetchScalarGridSpec(
            num_scalar_prefetch=0,
            grid=grid,
            in_specs=[pl.BlockSpec((tile_rows, lane), lambda i: (i, 0))],
            out_specs=pl.BlockSpec((tile_rows, lane), lambda i: (i, 0)),
        ),
        input_output_aliases={0: 0},
        compiler_params=compiler_params,
    )(x2d)

    return out.reshape(orig_shape)


if __name__ == "__main__":
    key = jax.random.PRNGKey(0)
    x = jax.random.normal(key, (2, 4, 16, 16), dtype=jnp.float32)  # NCHW

    y = base_model_forward(x)
    y = jax.block_until_ready(y)

    assert y.shape == x.shape and y.dtype == x.dtype
    assert bool(jnp.allclose(y, x))
    print("KERNEL_OK")
</pallas_src>

<mosaic_0001>
module attributes {stable_mosaic.version = 11 : i64} {
  func.func @_identity_kernel(%arg0: i32, %arg1: memref<4x512xf32, #tpu.memory_space<vmem>>, %arg2: memref<4x512xf32, #tpu.memory_space<vmem>>) attributes {dimension_semantics = [#tpu.dimension_semantics<parallel>], iteration_bounds = array<i64: 1>, scalar_prefetch = 0 : i64, scratch_operands = 0 : i64, tpu.core_type = #tpu.core_type<tc>, window_params = [{transform_indices = @transform_0, window_bounds = array<i64: 4, 512>}, {transform_indices = @transform_1, window_bounds = array<i64: 4, 512>}]} {
    %c0 = arith.constant 0 : index
    %c0_0 = arith.constant 0 : index
    %0 = vector.load %arg1[%c0, %c0_0] : memref<4x512xf32, #tpu.memory_space<vmem>>, vector<4x512xf32>
    %c0_1 = arith.constant 0 : index
    %c0_2 = arith.constant 0 : index
    %1 = vector.load %arg2[%c0_1, %c0_2] : memref<4x512xf32, #tpu.memory_space<vmem>>, vector<4x512xf32>
    tpu.vector_store %arg2[%c0_1, %c0_2], %0 {strides = array<i32>} : memref<4x512xf32, #tpu.memory_space<vmem>>, vector<4x512xf32>,
    return
  }
  func.func @transform_0(%arg0: i32) -> (i32, i32) {
    %c0_i32 = arith.constant 0 : i32
    %c0_i32_0 = arith.constant 0 : i32
    return %arg0, %c0_i32 : i32, i32
  }
  func.func @transform_1(%arg0: i32) -> (i32, i32) {
    %c0_i32 = arith.constant 0 : i32
    %c0_i32_0 = arith.constant 0 : i32
    return %arg0, %c0_i32 : i32, i32
  }
}

</mosaic_0001>

<llo_original>
// kernel: tpu_custom_call.1
$region0: #{tpu_custom_call.1}
  #allocation0 [shape = 'u32[]', space=smem, size = 0x4, offset = 0x4, fixed_abs, tag = 'smem constant byte address 0x4 - core index']
  #allocation1 [shape = 'u32[144,128]{1,0:T(1,128)}', space=vmem, size = 0x12000, scoped, tag = 'internal scratch']
  %s0 = inlined_call_operand.hbm [shape: f32[4,512], index: 0, kind: input, shape index: {}, may-alias: {0,1}]
  %s1 = inlined_call_operand.hbm [shape: f32[4,512], index: 1, kind: output, shape index: {}, may-alias: {0,1}]
  %s2 = sld [smem:[#allocation0]]
  $region18: #{tpu_custom_call.1} parent=0
    _
  %s4 = ssub.s32 1, %s2
  %s5 = scalar_select 0, %s4, %s2
  $region1: #{tpu_custom_call.1} parent=0
    #allocation2 [shape = 'u8[8192]{0}', space=vmem, size = 0x2000, scoped, tag = 'input window, operand 0, single buffered']
    #allocation3 [shape = 's32[1]{0}', space=sflag, size = 0x4, scoped, tag = 'scoped memory for tpu_custom_call.1']
    #allocation4 [shape = 's32[1]{0}', space=sflag, size = 0x4, scoped, tag = 'scoped memory for tpu_custom_call.1']
    #allocation5 [shape = 'u8[8192]{0}', space=vmem, size = 0x2000, scoped, tag = 'output window, operand 0, single buffered']
    %6 = vsyncpa [#allocation3], 0
    %7 = vsyncpa [#allocation4], 0
    // Predicated region
    $region2: #{tpu_custom_call.1} parent=1 // pred_check
      _
    $region3: #{tpu_custom_call.1} parent=1 // pred_check_branch
      %9 = sbr.rel (0) target = $region5
    $region4: #{tpu_custom_call.1} parent=1 // pred_region
      %s11 = ssub.s32 256, 256
      %12 = vsyncadd [#allocation3], %s11
      %s14 = sshll.u32 [#allocation2], 4
      %s15 = int_to_ptr.vmem [resolvable:$true] %s14
      %17 = dma.hbm_to_vmem [thread:$0]  %s0, 256, %s15, [#allocation3]
    $region5: #{tpu_custom_call.1} parent=1 // pred_fallthru
      _
    // Predicated region
    $region6: #{tpu_custom_call.1} parent=1 // pred_check
      _
    $region7: #{tpu_custom_call.1} parent=1 // pred_check_branch
      %19 = sbr.rel (0) target = $region9
    $region8: #{tpu_custom_call.1} parent=1 // pred_region
      %20 = dma.done [#allocation3], 256
    $region9: #{tpu_custom_call.1} parent=1 // pred_fallthru
      _
    %v21 = vld [vmem:[#allocation2] sm:$0xff]
    %v22 = vld [vmem:[#allocation2 + $0x8] sm:$0xff]
    %23 = vst [vmem:[#allocation5] sm:$0xff] %v21
    %24 = vst [vmem:[#allocation5 + $0x8] sm:$0xff] %v22
    // Predicated region
    $region10: #{tpu_custom_call.1} parent=1 // pred_check
      _
    $region11: #{tpu_custom_call.1} parent=1 // pred_check_branch
      %26 = sbr.rel (0) target = $region13
    $region12: #{tpu_custom_call.1} parent=1 // pred_region
      %s28 = ssub.s32 256, 256
      %29 = vsyncadd [#allocation4], %s28
      %s31 = sshll.u32 [#allocation5], 4
      %s32 = int_to_ptr.vmem [resolvable:$true] %s31
      %34 = dma.vmem_to_hbm [thread:$0]  %s32, 256, %s1, [#allocation4]
    $region13: #{tpu_custom_call.1} parent=1 // pred_fallthru
      _
    // Predicated region
    $region14: #{tpu_custom_call.1} parent=1 // pred_check
      _
    $region15: #{tpu_custom_call.1} parent=1 // pred_check_branch
      %36 = sbr.rel (0) target = $region17
    $region16: #{tpu_custom_call.1} parent=1 // pred_region
      %37 = dma.done [#allocation4], 256
    $region17: #{tpu_custom_call.1} parent=1 // pred_fallthru
      _
    %38 = vsyncpa [#allocation3], 1
    %39 = vsyncpa [#allocation4], 1

</llo_original>
